<compile_context>
chip_gen: v6e
topology: v6e:2x2x1
jax: 0.10.0
libtpu: 0.0.40
codegen_flags: <defaults>
</compile_context>

<pallas_src>
from fractions import Fraction
from math import factorial

import numpy as np
import jax
import jax.numpy as jnp
from jax import lax
from jax.experimental import pallas as pl
from jax.experimental.pallas import tpu as pltpu


# ----------------------- Rs bookkeeping (mirrors e3nn/rs.py) -----------------------
def convention(Rs):
    out = []
    for r in Rs:
        if isinstance(r, int):
            mul, l, p = 1, r, 0
        elif len(r) == 2:
            (mul, l), p = r, 0
        else:
            mul, l, p = r
        assert isinstance(mul, int) and mul >= 0
        assert isinstance(l, int) and l >= 0
        assert p in [0, 1, -1]
        out.append((mul, l, p))
    return out


def dim(Rs):
    Rs = convention(Rs)
    return sum(mul * (2 * l + 1) for mul, l, _ in Rs)


def simplify(Rs):
    out = []
    Rs = convention(Rs)
    for mul, l, p in Rs:
        if out and out[-1][1:] == (l, p):
            out[-1] = (out[-1][0] + mul, l, p)
        elif mul > 0:
            out.append((mul, l, p))
    return out


def selection_rule(l1, p1, l2, p2, lmax=None):
    ls = list(range(abs(l1 - l2), l1 + l2 + 1))
    if lmax is not None:
        ls = [l for l in ls if l <= lmax]
    return ls


# ----------------------- Wigner 3j (real basis), deterministic ---------------------
def _su2_cg(idx1, idx2, idx3):
    j1, m1 = idx1
    j2, m2 = idx2
    j3, m3 = idx3
    if m3 != m1 + m2:
        return 0.0
    vmin = int(max([-j1 + j2 + m3, -j1 + m1, 0]))
    vmax = int(min([j2 + j3 + m1, j3 - j1 + j2, j3 + m3]))

    def f(n):
        assert n == round(n)
        return factorial(round(n))

    C = ((2.0 * j3 + 1.0) * Fraction(
        f(j3 + j1 - j2) * f(j3 - j1 + j2) * f(j1 + j2 - j3) * f(j3 + m3) * f(j3 - m3),
        f(j1 + j2 + j3 + 1) * f(j1 - m1) * f(j1 + m1) * f(j2 - m2) * f(j2 + m2))) ** 0.5
    S = 0
    for v in range(vmin, vmax + 1):
        S += (-1) ** int(v + j2 + m2) * Fraction(
            f(j2 + j3 + m1 - v) * f(j1 - m1 + v),
            f(v) * f(j3 - j1 + j2 - v) * f(j3 + m3 - v) * f(v + j1 - j2 - m3))
    return float(C * S)


def _su2_clebsch_gordan(j1, j2, j3):
    mat = np.zeros((2 * j1 + 1, 2 * j2 + 1, 2 * j3 + 1), dtype=np.float64)
    if abs(j1 - j2) <= j3 <= j1 + j2:
        for m1 in range(-j1, j1 + 1):
            for m2 in range(-j2, j2 + 1):
                if abs(m1 + m2) <= j3:
                    mat[j1 + m1, j2 + m2, j3 + m1 + m2] = _su2_cg((j1, m1), (j2, m2), (j3, m1 + m2))
    return mat / (2 * j3 + 1) ** 0.5


def _change_basis_real_to_complex(l):
    q = np.zeros((2 * l + 1, 2 * l + 1), dtype=np.complex128)
    for m in range(-l, 0):
        q[l + m, l + abs(m)] = 1 / 2 ** 0.5
        q[l + m, l - abs(m)] = -1j / 2 ** 0.5
    q[l, l] = 1
    for m in range(1, l + 1):
        q[l + m, l + abs(m)] = (-1) ** m / 2 ** 0.5
        q[l + m, l - abs(m)] = 1j * (-1) ** m / 2 ** 0.5
    return (-1j) ** l * q


def wigner_3j(l1, l2, l3):
    """Real-basis Wigner 3j tensor of shape (2l1+1, 2l2+1, 2l3+1), Frobenius-normalized."""
    C = _su2_clebsch_gordan(l1, l2, l3).astype(np.complex128)
    Q1 = _change_basis_real_to_complex(l1)
    Q2 = _change_basis_real_to_complex(l2)
    Q3 = _change_basis_real_to_complex(l3)
    C = np.einsum('ij,kl,mn,ikn->jlm', Q1, Q2, np.conj(Q3.T), C)
    assert np.max(np.abs(C.imag)) < 1e-5
    C = np.real(C)
    n = np.linalg.norm(C)
    if n > 0:
        C = C / n
    return C


# ----------------------- elementwise tensor product mixing matrix ------------------
def elementwise_tensor_product_matrix(Rs_in1, Rs_in2, normalization='component'):
    assert normalization in ['norm', 'component']
    Rs_in1 = [list(r) for r in simplify(Rs_in1)]
    Rs_in2 = [list(r) for r in simplify(Rs_in2)]
    assert sum(m for m, _, _ in Rs_in1) == sum(m for m, _, _ in Rs_in2)

    i = 0
    while i < len(Rs_in1):
        mul_1, l_1, p_1 = Rs_in1[i]
        mul_2, l_2, p_2 = Rs_in2[i]
        if mul_1 < mul_2:
            Rs_in2[i] = [mul_1, l_2, p_2]
            Rs_in2.insert(i + 1, [mul_2 - mul_1, l_2, p_2])
        if mul_2 < mul_1:
            Rs_in1[i] = [mul_2, l_1, p_1]
            Rs_in1.insert(i + 1, [mul_1 - mul_2, l_1, p_1])
        i += 1
    Rs_in1 = [tuple(r) for r in Rs_in1]
    Rs_in2 = [tuple(r) for r in Rs_in2]

    Rs_out = []
    for (mul, l_1, p_1), (mul_2, l_2, p_2) in zip(Rs_in1, Rs_in2):
        assert mul == mul_2
        for l in selection_rule(l_1, p_1, l_2, p_2):
            Rs_out.append((mul, l, p_1 * p_2))
    Rs_out = simplify(Rs_out)

    d_out, d_1, d_2 = dim(Rs_out), dim(Rs_in1), dim(Rs_in2)
    M = np.zeros((d_out, d_1, d_2), dtype=np.float64)
    index_out = index_1 = index_2 = 0
    for (mul, l_1, p_1), (mul_2, l_2, p_2) in zip(Rs_in1, Rs_in2):
        dim_1 = mul * (2 * l_1 + 1)
        dim_2 = mul * (2 * l_2 + 1)
        for l_out in selection_rule(l_1, p_1, l_2, p_2):
            dim_o = mul * (2 * l_out + 1)
            C = wigner_3j(l_out, l_1, l_2)
            if normalization == 'component':
                C = C * (2 * l_out + 1) ** 0.5
            if normalization == 'norm':
                C = C * ((2 * l_1 + 1) ** 0.5 * (2 * l_2 + 1) ** 0.5)
            I = np.einsum('uv,wu->wuv', np.eye(mul), np.eye(mul))
            m = np.einsum('wuv,kij->wkuivj', I, C).reshape(dim_o, dim_1, dim_2)
            M[index_out:index_out + dim_o,
              index_1:index_1 + dim_1,
              index_2:index_2 + dim_2] += m
            index_out += dim_o
        index_1 += dim_1
        index_2 += dim_2
    # rows: out index k; cols: i * dim(Rs_in2) + j   (matches the sparse buffer layout)
    return Rs_out, M.reshape(d_out, d_1 * d_2)


# ----------------------- Pallas kernel ---------------------------------------------
def _round_up(x, m):
    return ((x + m - 1) // m) * m


def _make_zlane_kernel(nz_by_k):
    """Kernel with Z on the lane axis: out[k, z] = sum_{(i,j,v) in nz[k]} v*f1[i,z]*f2[j,z]."""
    d_out = len(nz_by_k)

    def kernel(f1_ref, f2_ref, o_ref):
        f1 = f1_ref[...].astype(jnp.float32)   # (d1, tz)   Z on lanes, channels on sublanes
        f2 = f2_ref[...].astype(jnp.float32)   # (d2, tz)
        tz = f1.shape[1]

        # cache the unique per-(i, j) elementwise products (reused across l_out paths)
        prods = {}

        def pair(i, j):
            if (i, j) not in prods:
                prods[(i, j)] = f1[i:i + 1, :] * f2[j:j + 1, :]
            return prods[(i, j)]

        rows = []
        for k in range(d_out):
            acc = None
            for (i, j, v) in nz_by_k[k]:
                t = pair(i, j)
                if abs(v - 1.0) > 1e-12:
                    t = t * jnp.float32(v)
                acc = t if acc is None else acc + t
            if acc is None:
                acc = jnp.zeros((1, tz), jnp.float32)
            rows.append(acc)
        # single lane-dense store of the whole (d_out, tz) output slab
        o_ref[...] = jnp.concatenate(rows, axis=0).astype(o_ref.dtype)

    return kernel


def _etp_pallas_zlane(f1t, f2t, nz_by_k, out_dtype, tz):
    """f1t: (d1, Zp), f2t: (d2, Zp)  ->  (d_out, Zp); Zp % tz == 0, tz % 128 == 0."""
    d1, Zp = f1t.shape
    d2, _ = f2t.shape
    d_out = len(nz_by_k)
    assert Zp % tz == 0 and tz % 128 == 0

    kernel = _make_zlane_kernel(nz_by_k)
    return pl.pallas_call(
        kernel,
        out_shape=jax.ShapeDtypeStruct((d_out, Zp), out_dtype),
        grid_spec=pltpu.PrefetchScalarGridSpec(
            num_scalar_prefetch=0,
            grid=(Zp // tz,),
            in_specs=[
                pl.BlockSpec((d1, tz), lambda z: (0, z)),
                pl.BlockSpec((d2, tz), lambda z: (0, z)),
            ],
            out_specs=pl.BlockSpec((d_out, tz), lambda z: (0, z)),
        ),
        compiler_params=pltpu.CompilerParams(
            dimension_semantics=("parallel",)),
    )(f1t, f2t)


# ----------------------- Module-equivalent wrapper ----------------------------------
class ElementwiseTensorProduct:
    def __init__(self, Rs_in1, Rs_in2, normalization='component', tile_z=512):
        self.Rs_in1 = simplify(Rs_in1)
        self.Rs_in2 = simplify(Rs_in2)
        assert sum(m for m, _, _ in self.Rs_in1) == sum(m for m, _, _ in self.Rs_in2)
        self.Rs_out, M = elementwise_tensor_product_matrix(
            self.Rs_in1, self.Rs_in2, normalization)
        d_out, d1, d2 = dim(self.Rs_out), dim(self.Rs_in1), dim(self.Rs_in2)

        # w[i, j, k] = M[k, i*d2 + j]; kept only for reference checks.
        w_ijk = M.reshape(d_out, d1, d2).transpose(1, 2, 0)
        self.w = jnp.asarray(w_ijk, jnp.float32)

        # Block-sparse structure of the mixing matrix: per output row k, the
        # list of (i, j, value) nonzeros.  These are baked into the kernel as
        # compile-time constants, so no dense w ever touches HBM/VMEM.
        nz_by_k = [[] for _ in range(d_out)]
        ii, jj, kk = np.nonzero(w_ijk)
        for i, j, k in zip(ii.tolist(), jj.tolist(), kk.tolist()):
            nz_by_k[k].append((int(i), int(j), float(w_ijk[i, j, k])))
        self._nz_by_k = nz_by_k
        self.tile_z = int(tile_z)
        # TODO(synk): for very large Rs (tens of thousands of nonzeros) add a
        # per-(l1,l2,l_out) path vectorized over multiplicity (or a dense
        # reshaped-dot MXU fallback) to bound the unroll/compile cost.

    def __call__(self, features_1, features_2):
        d1, d2, d_out = dim(self.Rs_in1), dim(self.Rs_in2), dim(self.Rs_out)
        size = jnp.broadcast_shapes(features_1.shape[:-1], features_2.shape[:-1])
        f1 = jnp.broadcast_to(features_1, size + (d1,)).reshape(-1, d1)
        f2 = jnp.broadcast_to(features_2, size + (d2,)).reshape(-1, d2)
        Z = f1.shape[0]
        out_dtype = jnp.result_type(f1.dtype, f2.dtype)

        # Big Z tiles on the lane axis (multiple of 128): amortizes grid-step
        # overhead; shrink for tiny batches so we don't over-pad.
        tz = max(128, _round_up(self.tile_z, 128))
        tz = min(tz, _round_up(max(Z, 1), 128))
        Zp = _round_up(max(Z, 1), tz)

        if Zp != Z:
            f1 = jnp.pad(f1, ((0, Zp - Z), (0, 0)))
            f2 = jnp.pad(f2, ((0, Zp - Z), (0, 0)))

        # Z-on-lane layout: channels on sublanes, flattened batch on lanes.
        out_t = _etp_pallas_zlane(f1.T, f2.T, self._nz_by_k, out_dtype, tz)
        return out_t.T[:Z].reshape(*size, d_out)


# ----------------------- demo / test -------------------------------------------------
if __name__ == "__main__":
    # Rs: 2 scalars (l=0) + 1 vector (l=1)  ->  dim = 5
    Rs_in1 = [(2, 0), (1, 1)]
    Rs_in2 = [(2, 0), (1, 1)]
    etp = ElementwiseTensorProduct(Rs_in1, Rs_in2)

    key = jax.random.PRNGKey(0)
    k1, k2, k3, k4 = jax.random.split(key, 4)

    batch, seq = 2, 8
    f1 = jax.random.normal(k1, (batch, seq, dim(Rs_in1)), dtype=jnp.float32)
    f2 = jax.random.normal(k2, (batch, seq, dim(Rs_in2)), dtype=jnp.float32)

    out = jax.block_until_ready(etp(f1, f2))
    assert out.shape == (batch, seq, dim(etp.Rs_out)), out.shape

    ref = jnp.einsum('...i,...j,ijk->...k', f1, f2, etp.w,
                     precision=lax.Precision.HIGHEST)
    assert jnp.allclose(out, ref, atol=1e-4, rtol=1e-4)

    # Second check: Z not a tile multiple, multi-step grid, leading-dim broadcasting.
    etp_t128 = ElementwiseTensorProduct(Rs_in1, Rs_in2, tile_z=128)
    g1 = jax.random.normal(k3, (3, 100, dim(Rs_in1)), dtype=jnp.float32)
    g2 = jax.random.normal(k4, (100, dim(Rs_in2)), dtype=jnp.float32)
    out2 = jax.block_until_ready(etp_t128(g1, g2))
    assert out2.shape == (3, 100, dim(etp_t128.Rs_out)), out2.shape
    g2b = jnp.broadcast_to(g2, (3, 100, dim(Rs_in2)))
    ref2 = jnp.einsum('...i,...j,ijk->...k', g1, g2b, etp_t128.w,
                      precision=lax.Precision.HIGHEST)
    assert jnp.allclose(out2, ref2, atol=1e-4, rtol=1e-4)

    print("KERNEL_OK")
</pallas_src>

<mosaic_0001>
module attributes {stable_mosaic.version = 11 : i64} {
  func.func @kernel(%arg0: i32, %arg1: memref<5x128xf32, #tpu.memory_space<vmem>>, %arg2: memref<5x128xf32, #tpu.memory_space<vmem>>, %arg3: memref<11x128xf32, #tpu.memory_space<vmem>>) attributes {dimension_semantics = [#tpu.dimension_semantics<parallel>], iteration_bounds = array<i64: 1>, scalar_prefetch = 0 : i64, scratch_operands = 0 : i64, tpu.core_type = #tpu.core_type<tc>, window_params = [{transform_indices = @transform_0, window_bounds = array<i64: 5, 128>}, {transform_indices = @transform_1, window_bounds = array<i64: 5, 128>}, {transform_indices = @transform_2, window_bounds = array<i64: 11, 128>}]} {
    %c0 = arith.constant 0 : index
    %c0_0 = arith.constant 0 : index
    %0 = vector.load %arg1[%c0, %c0_0] : memref<5x128xf32, #tpu.memory_space<vmem>>, vector<5x128xf32>
    %c0_1 = arith.constant 0 : index
    %c0_2 = arith.constant 0 : index
    %1 = vector.load %arg2[%c0_1, %c0_2] : memref<5x128xf32, #tpu.memory_space<vmem>>, vector<5x128xf32>
    %2 = vector.extract_strided_slice %0 {offsets = [0, 0], sizes = [1, 128], strides = [1, 1]} : vector<5x128xf32> to vector<1x128xf32>
    %3 = vector.extract_strided_slice %1 {offsets = [0, 0], sizes = [1, 128], strides = [1, 1]} : vector<5x128xf32> to vector<1x128xf32>
    %4 = arith.mulf %2, %3 : vector<1x128xf32>
    %5 = vector.extract_strided_slice %0 {offsets = [1, 0], sizes = [1, 128], strides = [1, 1]} : vector<5x128xf32> to vector<1x128xf32>
    %6 = vector.extract_strided_slice %1 {offsets = [1, 0], sizes = [1, 128], strides = [1, 1]} : vector<5x128xf32> to vector<1x128xf32>
    %7 = arith.mulf %5, %6 : vector<1x128xf32>
    %8 = vector.extract_strided_slice %0 {offsets = [2, 0], sizes = [1, 128], strides = [1, 1]} : vector<5x128xf32> to vector<1x128xf32>
    %9 = vector.extract_strided_slice %1 {offsets = [2, 0], sizes = [1, 128], strides = [1, 1]} : vector<5x128xf32> to vector<1x128xf32>
    %10 = arith.mulf %8, %9 : vector<1x128xf32>
    %cst = arith.constant 0.577350259 : f32
    %11 = vector.broadcast %cst : f32 to vector<1x128xf32>
    %12 = arith.mulf %10, %11 : vector<1x128xf32>
    %13 = vector.extract_strided_slice %0 {offsets = [3, 0], sizes = [1, 128], strides = [1, 1]} : vector<5x128xf32> to vector<1x128xf32>
    %14 = vector.extract_strided_slice %1 {offsets = [3, 0], sizes = [1, 128], strides = [1, 1]} : vector<5x128xf32> to vector<1x128xf32>
    %15 = arith.mulf %13, %14 : vector<1x128xf32>
    %cst_3 = arith.constant 0.577350259 : f32
    %16 = vector.broadcast %cst_3 : f32 to vector<1x128xf32>
    %17 = arith.mulf %15, %16 : vector<1x128xf32>
    %18 = arith.addf %12, %17 : vector<1x128xf32>
    %19 = vector.extract_strided_slice %0 {offsets = [4, 0], sizes = [1, 128], strides = [1, 1]} : vector<5x128xf32> to vector<1x128xf32>
    %20 = vector.extract_strided_slice %1 {offsets = [4, 0], sizes = [1, 128], strides = [1, 1]} : vector<5x128xf32> to vector<1x128xf32>
    %21 = arith.mulf %19, %20 : vector<1x128xf32>
    %cst_4 = arith.constant 0.577350259 : f32
    %22 = vector.broadcast %cst_4 : f32 to vector<1x128xf32>
    %23 = arith.mulf %21, %22 : vector<1x128xf32>
    %24 = arith.addf %18, %23 : vector<1x128xf32>
    %25 = vector.extract_strided_slice %0 {offsets = [3, 0], sizes = [1, 128], strides = [1, 1]} : vector<5x128xf32> to vector<1x128xf32>
    %26 = vector.extract_strided_slice %1 {offsets = [4, 0], sizes = [1, 128], strides = [1, 1]} : vector<5x128xf32> to vector<1x128xf32>
    %27 = arith.mulf %25, %26 : vector<1x128xf32>
    %cst_5 = arith.constant 0.707106769 : f32
    %28 = vector.broadcast %cst_5 : f32 to vector<1x128xf32>
    %29 = arith.mulf %27, %28 : vector<1x128xf32>
    %30 = vector.extract_strided_slice %0 {offsets = [4, 0], sizes = [1, 128], strides = [1, 1]} : vector<5x128xf32> to vector<1x128xf32>
    %31 = vector.extract_strided_slice %1 {offsets = [3, 0], sizes = [1, 128], strides = [1, 1]} : vector<5x128xf32> to vector<1x128xf32>
    %32 = arith.mulf %30, %31 : vector<1x128xf32>
    %cst_6 = arith.constant -0.707106769 : f32
    %33 = vector.broadcast %cst_6 : f32 to vector<1x128xf32>
    %34 = arith.mulf %32, %33 : vector<1x128xf32>
    %35 = arith.addf %29, %34 : vector<1x128xf32>
    %36 = vector.extract_strided_slice %0 {offsets = [2, 0], sizes = [1, 128], strides = [1, 1]} : vector<5x128xf32> to vector<1x128xf32>
    %37 = vector.extract_strided_slice %1 {offsets = [4, 0], sizes = [1, 128], strides = [1, 1]} : vector<5x128xf32> to vector<1x128xf32>
    %38 = arith.mulf %36, %37 : vector<1x128xf32>
    %cst_7 = arith.constant -0.707106769 : f32
    %39 = vector.broadcast %cst_7 : f32 to vector<1x128xf32>
    %40 = arith.mulf %38, %39 : vector<1x128xf32>
    %41 = vector.extract_strided_slice %0 {offsets = [4, 0], sizes = [1, 128], strides = [1, 1]} : vector<5x128xf32> to vector<1x128xf32>
    %42 = vector.extract_strided_slice %1 {offsets = [2, 0], sizes = [1, 128], strides = [1, 1]} : vector<5x128xf32> to vector<1x128xf32>
    %43 = arith.mulf %41, %42 : vector<1x128xf32>
    %cst_8 = arith.constant 0.707106769 : f32
    %44 = vector.broadcast %cst_8 : f32 to vector<1x128xf32>
    %45 = arith.mulf %43, %44 : vector<1x128xf32>
    %46 = arith.addf %40, %45 : vector<1x128xf32>
    %47 = vector.extract_strided_slice %0 {offsets = [2, 0], sizes = [1, 128], strides = [1, 1]} : vector<5x128xf32> to vector<1x128xf32>
    %48 = vector.extract_strided_slice %1 {offsets = [3, 0], sizes = [1, 128], strides = [1, 1]} : vector<5x128xf32> to vector<1x128xf32>
    %49 = arith.mulf %47, %48 : vector<1x128xf32>
    %cst_9 = arith.constant 0.707106769 : f32
    %50 = vector.broadcast %cst_9 : f32 to vector<1x128xf32>
    %51 = arith.mulf %49, %50 : vector<1x128xf32>
    %52 = vector.extract_strided_slice %0 {offsets = [3, 0], sizes = [1, 128], strides = [1, 1]} : vector<5x128xf32> to vector<1x128xf32>
    %53 = vector.extract_strided_slice %1 {offsets = [2, 0], sizes = [1, 128], strides = [1, 1]} : vector<5x128xf32> to vector<1x128xf32>
    %54 = arith.mulf %52, %53 : vector<1x128xf32>
    %cst_10 = arith.constant -0.707106769 : f32
    %55 = vector.broadcast %cst_10 : f32 to vector<1x128xf32>
    %56 = arith.mulf %54, %55 : vector<1x128xf32>
    %57 = arith.addf %51, %56 : vector<1x128xf32>
    %cst_11 = arith.constant 0.707106769 : f32
    %58 = vector.broadcast %cst_11 : f32 to vector<1x128xf32>
    %59 = arith.mulf %38, %58 : vector<1x128xf32>
    %cst_12 = arith.constant 0.707106769 : f32
    %60 = vector.broadcast %cst_12 : f32 to vector<1x128xf32>
    %61 = arith.mulf %43, %60 : vector<1x128xf32>
    %62 = arith.addf %59, %61 : vector<1x128xf32>
    %cst_13 = arith.constant 0.707106769 : f32
    %63 = vector.broadcast %cst_13 : f32 to vector<1x128xf32>
    %64 = arith.mulf %49, %63 : vector<1x128xf32>
    %cst_14 = arith.constant 0.707106769 : f32
    %65 = vector.broadcast %cst_14 : f32 to vector<1x128xf32>
    %66 = arith.mulf %54, %65 : vector<1x128xf32>
    %67 = arith.addf %64, %66 : vector<1x128xf32>
    %cst_15 = arith.constant -0.408248305 : f32
    %68 = vector.broadcast %cst_15 : f32 to vector<1x128xf32>
    %69 = arith.mulf %10, %68 : vector<1x128xf32>
    %cst_16 = arith.constant 0.816496611 : f32
    %70 = vector.broadcast %cst_16 : f32 to vector<1x128xf32>
    %71 = arith.mulf %15, %70 : vector<1x128xf32>
    %72 = arith.addf %69, %71 : vector<1x128xf32>
    %cst_17 = arith.constant -0.408248305 : f32
    %73 = vector.broadcast %cst_17 : f32 to vector<1x128xf32>
    %74 = arith.mulf %21, %73 : vector<1x128xf32>
    %75 = arith.addf %72, %74 : vector<1x128xf32>
    %cst_18 = arith.constant 0.707106769 : f32
    %76 = vector.broadcast %cst_18 : f32 to vector<1x128xf32>
    %77 = arith.mulf %27, %76 : vector<1x128xf32>
    %cst_19 = arith.constant 0.707106769 : f32
    %78 = vector.broadcast %cst_19 : f32 to vector<1x128xf32>
    %79 = arith.mulf %32, %78 : vector<1x128xf32>
    %80 = arith.addf %77, %79 : vector<1x128xf32>
    %cst_20 = arith.constant -0.707106769 : f32
    %81 = vector.broadcast %cst_20 : f32 to vector<1x128xf32>
    %82 = arith.mulf %10, %81 : vector<1x128xf32>
    %cst_21 = arith.constant 0.707106769 : f32
    %83 = vector.broadcast %cst_21 : f32 to vector<1x128xf32>
    %84 = arith.mulf %21, %83 : vector<1x128xf32>
    %85 = arith.addf %82, %84 : vector<1x128xf32>
    %86 = tpu.concatenate %4, %7, %24, %35, %46, %57, %62, %67, %75, %80, %85 in 0 : vector<1x128xf32>, vector<1x128xf32>, vector<1x128xf32>, vector<1x128xf32>, vector<1x128xf32>, vector<1x128xf32>, vector<1x128xf32>, vector<1x128xf32>, vector<1x128xf32>, vector<1x128xf32>, vector<1x128xf32> -> vector<11x128xf32>
    %c0_22 = arith.constant 0 : index
    %c0_23 = arith.constant 0 : index
    %87 = vector.load %arg3[%c0_22, %c0_23] : memref<11x128xf32, #tpu.memory_space<vmem>>, vector<11x128xf32>
    tpu.vector_store %arg3[%c0_22, %c0_23], %86 {strides = array<i32>} : memref<11x128xf32, #tpu.memory_space<vmem>>, vector<11x128xf32>,
    return
  }
  func.func @transform_0(%arg0: i32) -> (i32, i32) {
    %c0_i32 = arith.constant 0 : i32
    %c0_i32_0 = arith.constant 0 : i32
    return %c0_i32, %arg0 : i32, i32
  }
  func.func @transform_1(%arg0: i32) -> (i32, i32) {
    %c0_i32 = arith.constant 0 : i32
    %c0_i32_0 = arith.constant 0 : i32
    return %c0_i32, %arg0 : i32, i32
  }
  func.func @transform_2(%arg0: i32) -> (i32, i32) {
    %c0_i32 = arith.constant 0 : i32
    %c0_i32_0 = arith.constant 0 : i32
    return %c0_i32, %arg0 : i32, i32
  }
}

</mosaic_0001>

<llo_original>
// kernel: tpu_custom_call.1
$region0: #{tpu_custom_call.1}
  #allocation0 [shape = 'u32[]', space=smem, size = 0x4, offset = 0x4, fixed_abs, tag = 'smem constant byte address 0x4 - core index']
  #allocation1 [shape = 'u32[144,128]{1,0:T(1,128)}', space=vmem, size = 0x12000, scoped, tag = 'internal scratch']
  %s0 = inlined_call_operand.hbm [shape: f32[5,128], index: 0, kind: input, shape index: {}]
  %s1 = inlined_call_operand.hbm [shape: f32[5,128], index: 1, kind: input, shape index: {}]
  %s2 = inlined_call_operand.hbm [shape: f32[11,128], index: 2, kind: output, shape index: {}]
  %s3 = sld [smem:[#allocation0]]
  $region26: #{tpu_custom_call.1} parent=0
    _
  %s5 = ssub.s32 1, %s3
  %s6 = scalar_select 0, %s5, %s3
  $region1: #{tpu_custom_call.1} parent=0
    #allocation2 [shape = 'u8[4096]{0}', space=vmem, size = 0x1000, scoped, tag = 'input window, operand 0, single buffered']
    #allocation3 [shape = 's32[1]{0}', space=sflag, size = 0x4, scoped, tag = 'scoped memory for tpu_custom_call.1']
    #allocation4 [shape = 's32[1]{0}', space=sflag, size = 0x4, scoped, tag = 'scoped memory for tpu_custom_call.1']
    #allocation5 [shape = 'u8[4096]{0}', space=vmem, size = 0x1000, scoped, tag = 'input window, operand 1, single buffered']
    #allocation6 [shape = 's32[1]{0}', space=sflag, size = 0x4, scoped, tag = 'scoped memory for tpu_custom_call.1']
    #allocation7 [shape = 'u8[8192]{0}', space=vmem, size = 0x2000, scoped, tag = 'output window, operand 0, single buffered']
    %7 = vsyncpa [#allocation3], 0
    %8 = vsyncpa [#allocation6], 0
    %9 = vsyncpa [#allocation4], 0
    // Predicated region
    $region2: #{tpu_custom_call.1} parent=1 // pred_check
      _
    $region3: #{tpu_custom_call.1} parent=1 // pred_check_branch
      %11 = sbr.rel (0) target = $region5
    $region4: #{tpu_custom_call.1} parent=1 // pred_region
      %s13 = ssub.s32 128, 128
      %14 = vsyncadd [#allocation3], %s13
      %s16 = sshll.u32 [#allocation2], 4
      %s17 = int_to_ptr.vmem [resolvable:$true] %s16
      %19 = dma.hbm_to_vmem [thread:$0]  %s0, 128, %s17, [#allocation3]
    $region5: #{tpu_custom_call.1} parent=1 // pred_fallthru
      _
    // Predicated region
    $region6: #{tpu_custom_call.1} parent=1 // pred_check
      _
    $region7: #{tpu_custom_call.1} parent=1 // pred_check_branch
      %21 = sbr.rel (0) target = $region9
    $region8: #{tpu_custom_call.1} parent=1 // pred_region
      %s23 = ssub.s32 128, 128
      %24 = vsyncadd [#allocation6], %s23
      %s26 = sshll.u32 [#allocation5], 4
      %s27 = int_to_ptr.vmem [resolvable:$true] %s26
      %29 = dma.hbm_to_vmem [thread:$0]  %s1, 128, %s27, [#allocation6]
    $region9: #{tpu_custom_call.1} parent=1 // pred_fallthru
      _
    // Predicated region
    $region10: #{tpu_custom_call.1} parent=1 // pred_check
      _
    $region11: #{tpu_custom_call.1} parent=1 // pred_check_branch
      %31 = sbr.rel (0) target = $region13
    $region12: #{tpu_custom_call.1} parent=1 // pred_region
      %32 = dma.done [#allocation3], 128
    $region13: #{tpu_custom_call.1} parent=1 // pred_fallthru
      _
    // Predicated region
    $region14: #{tpu_custom_call.1} parent=1 // pred_check
      _
    $region15: #{tpu_custom_call.1} parent=1 // pred_check_branch
      %34 = sbr.rel (0) target = $region17
    $region16: #{tpu_custom_call.1} parent=1 // pred_region
      %35 = dma.done [#allocation6], 128
    $region17: #{tpu_custom_call.1} parent=1 // pred_fallthru
      _
    %v36 = vld [vmem:[#allocation2] sm:$0x1f]
    %v37 = vld [vmem:[#allocation5] sm:$0x1f]
    %v38 = vmul.f32 %v36, %v37
    %v39 = vmul.f32 %v38, 0.57735026
    %v41 = vrot.slane %v39, 1
    %v43 = vadd.f32 %v39, %v41
    %v44 = vrot.slane %v39, 2
    %v46 = vadd.f32 %v43, %v44
    %v48 = vrot.slane %v37, 1
    %v50 = vmul.f32 %v36, %v48
    %v51 = vmul.f32 %v50, 0.70710677
    %v52 = vrot.slane %v37, 7
    %v54 = vmul.f32 %v36, %v52
    %v55 = vmul.f32 %v54, -0.70710677
    %v57 = vrot.slane %v55, 1
    %v59 = vadd.f32 %v51, %v57
    %v60 = vrot.slane %v37, 2
    %v62 = vmul.f32 %v36, %v60
    %v63 = vmul.f32 %v62, -0.70710677
    %v64 = vrot.slane %v37, 6
    %v66 = vmul.f32 %v36, %v64
    %v67 = vmul.f32 %v66, 0.70710677
    %v69 = vrot.slane %v67, 2
    %v71 = vadd.f32 %v63, %v69
    %v72 = vmul.f32 %v62, 0.70710677
    %v73 = vadd.f32 %v72, %v69
    %v74 = vmul.f32 %v54, 0.70710677
    %v76 = vrot.slane %v74, 1
    %v78 = vadd.f32 %v51, %v76
    %v79 = vmul.f32 %v38, -0.4082483
    %v80 = vmul.f32 %v38, 0.8164966
    %v82 = vrot.slane %v80, 1
    %v84 = vadd.f32 %v79, %v82
    %v86 = vrot.slane %v79, 2
    %v88 = vadd.f32 %v84, %v86
    %v89 = vmul.f32 %v38, -0.70710677
    %v90 = vmul.f32 %v38, 0.70710677
    %v92 = vrot.slane %v90, 2
    %v94 = vadd.f32 %v89, %v92
    %v96 = vrot.slane %v71, 6
    %v99 = vrot.slane %v59, 5
    %v102 = vrot.slane %v73, 4
    %v105 = vrot.slane %v78, 3
    %v108 = vrot.slane %v88, 2
    %v110 = vrot.slane %v78, 2
    %vm112 = vcmask 1040384
    %vm113 = vcmask 1041408
    %v114 = vsel %vm113, %v38, %v46
    %vm115 = vcmask 1042432
    %v116 = vsel %vm115, %v114, %v59
    %vm117 = vcmask 1043456
    %v118 = vsel %vm117, %v116, %v96
    %vm119 = vcmask 1044480
    %v120 = vsel %vm119, %v118, %v99
    %vm121 = vcmask 1045504
    %v122 = vsel %vm121, %v120, %v102
    %vm123 = vcmask 1046528
    %v124 = vsel %vm123, %v122, %v105
    %v125 = vsel %vm112, %v108, %v110
    %v126 = vsel %vm113, %v125, %v94
    %127 = vst [vmem:[#allocation7] sm:$0xff] %v124
    %128 = vst [vmem:[#allocation7 + $0x8] sm:$0x7] %v126
    // Predicated region
    $region18: #{tpu_custom_call.1} parent=1 // pred_check
      _
    $region19: #{tpu_custom_call.1} parent=1 // pred_check_branch
      %130 = sbr.rel (0) target = $region21
    $region20: #{tpu_custom_call.1} parent=1 // pred_region
      %s132 = ssub.s32 256, 256
      %133 = vsyncadd [#allocation4], %s132
      %s134 = sshll.u32 [#allocation7], 4
      %s135 = int_to_ptr.vmem [resolvable:$true] %s134
      %140 = dma.vmem_to_hbm [thread:$0]  %s135, 256, %s2, [#allocation4], 128, 128, 8
    $region21: #{tpu_custom_call.1} parent=1 // pred_fallthru
      _
    // Predicated region
    $region22: #{tpu_custom_call.1} parent=1 // pred_check
      _
    $region23: #{tpu_custom_call.1} parent=1 // pred_check_branch
      %142 = sbr.rel (0) target = $region25
    $region24: #{tpu_custom_call.1} parent=1 // pred_region
      %143 = dma.done [#allocation4], 256
    $region25: #{tpu_custom_call.1} parent=1 // pred_fallthru
      _
    %144 = vsyncpa [#allocation3], 1
    %145 = vsyncpa [#allocation6], 1
    %146 = vsyncpa [#allocation4], 1

</llo_original>
